<compile_context>
chip_gen: v6e
topology: v6e:2x2x1
jax: 0.10.0
libtpu: 0.0.40
codegen_flags: <defaults>
</compile_context>

<pallas_src>
import functools

import numpy as np

import jax
import jax.numpy as jnp
from jax import lax
from jax.experimental import pallas as pl
from jax.experimental.pallas import tpu as pltpu


_DIL = 4  # dilation / padding of the dilated 3x3 convs
_OFFSETS = [((kh - 1) * _DIL, (kw - 1) * _DIL)
            for kh in range(3) for kw in range(3)]


# ----------------------------------------------------------------------------
# One-time (cached) probe of pltpu.roll's lane-rotate direction.  The main
# kernel then emits exactly one roll per tap, with the direction baked in
# statically -- no dual-roll select in the hot path.
# ----------------------------------------------------------------------------
def _roll_probe_kernel(x_ref, o_ref):
    o_ref[...] = pltpu.roll(x_ref[...], 1, axis=1)


@functools.lru_cache(maxsize=None)
def _roll_matches_jnp() -> bool:
    x = jnp.broadcast_to(jnp.arange(128, dtype=jnp.int32)[None, :], (8, 128))
    out = pl.pallas_call(
        _roll_probe_kernel,
        out_shape=jax.ShapeDtypeStruct((8, 128), jnp.int32),
    )(x)
    return bool(jnp.array_equal(out, jnp.roll(x, 1, axis=1)))


# ----------------------------------------------------------------------------
# Kernel
# ----------------------------------------------------------------------------
def bam_kernel(x_ref, w_ref, out_ref, *, H, W, C, MID, bt, offs, roll_fwd):
    HW = H * W
    R = bt * MID          # reduced (spatial-gate) rows of the slab
    RC = bt * C           # channel rows of the slab
    L = HW

    def wld(name):
        o, r, c = offs[name]
        return w_ref[o:o + r, 0:c]

    def roll_back(v, off):
        # result[:, l] = v[:, (l + off) % L]   (== jnp.roll(v, -off, axis=1))
        a = (-off) % L
        if a == 0:
            return v
        if not roll_fwd:
            a = L - a
        return pltpu.roll(v, a, axis=1)

    x = x_ref[...].astype(jnp.float32)                         # (RC, HW)

    # ---- channel gate: global avg pool -> FC -> BN(folded) -> ReLU -> FC ---
    pooled = jnp.mean(x, axis=1, keepdims=True)                # (RC, 1)
    h1 = jnp.dot(wld('fc1_w'), pooled, preferred_element_type=jnp.float32)
    h1 = jnp.maximum(h1 + wld('fc1_b'), 0.0)                   # (R, 1)
    ch = jnp.dot(wld('fc2_w'), h1,
                 preferred_element_type=jnp.float32) + wld('fc2_b')   # (RC, 1)

    # ---- spatial gate: 1x1 reduce -> 2x dilated 3x3 -> 1x1 to one channel --
    t = jnp.dot(wld('cr_w'), x, preferred_element_type=jnp.float32) + wld('cr_b')
    t = jnp.maximum(t, 0.0)                                    # (R, HW)

    # Hoisted per-tap edge masks (f32, (1, HW)); identical for every image in
    # the slab, and they also guarantee a lane roll never reads across an
    # image boundary.
    lane = lax.broadcasted_iota(jnp.int32, (1, HW), 1)
    hh, ww = lane // W, lane % W
    masks = []
    for dh, dw in _OFFSETS:
        ok = (hh + dh >= 0) & (hh + dh < H) & (ww + dw >= 0) & (ww + dw < W)
        masks.append(ok.astype(jnp.float32))

    for j in range(2):                                         # two dilated convs
        acc = jnp.zeros((R, HW), jnp.float32)
        for k, (dh, dw) in enumerate(_OFFSETS):
            off = dh * W + dw
            tap = t if off == 0 else roll_back(t, off) * masks[k]
            acc = acc + jnp.dot(wld(f'd{j}_k{k}'), tap,
                                preferred_element_type=jnp.float32)
        t = jnp.maximum(acc + wld(f'd{j}_b'), 0.0)             # (R, HW)

    # Final 1x1 conv to a single channel fused with its broadcast back to the
    # C channels of each image: one (RC, R) x (R, HW) matmul.
    sp = jnp.dot(wld('cf_w'), t,
                 preferred_element_type=jnp.float32) + wld('cf_b')    # (RC, HW)

    # ---- combine: att = 1 + sigmoid(channel * spatial); out = att * x ------
    att = 1.0 + jax.nn.sigmoid(ch * sp)
    out_ref[...] = (att * x).astype(out_ref.dtype)


# ----------------------------------------------------------------------------
# Host-side weight packing (one coalesced array) and wrapper
# ----------------------------------------------------------------------------
def _bdiag(block, n):
    r, c = block.shape
    out = np.zeros((n * r, n * c), np.float32)
    for b in range(n):
        out[b * r:(b + 1) * r, b * c:(b + 1) * c] = block
    return out


def _pack_weights(p, bt):
    """Coalesce all weights into one packed f32 array (rows 8-aligned, lanes
    padded to a multiple of 128).  BN scales are folded into weight rows and
    each per-image block is repeated block-diagonally for the batch tile.
    (For very large C one could split wide/narrow blocks into two arrays to
    avoid lane-padding waste; at these sizes one array is simplest.)"""
    f = lambda a: np.asarray(a, np.float32)
    cr_w = f(p['cr_w'])
    C, MID = cr_w.shape

    col = lambda v: f(v).reshape(-1, 1)
    tile_col = lambda v: np.tile(col(v), (bt, 1))

    blocks = []
    blocks.append(('fc1_w', _bdiag(col(p['fc1_s']) * f(p['fc1_w']).T, bt)))   # (R, RC)
    blocks.append(('fc2_w', _bdiag(f(p['fc2_w']).T, bt)))                     # (RC, R)
    blocks.append(('cr_w',  _bdiag(col(p['cr_s']) * cr_w.T, bt)))             # (R, RC)
    blocks.append(('cf_w',  _bdiag(
        np.broadcast_to(f(p['cf_w']).reshape(1, MID), (C, MID)).copy(), bt))) # (RC, R)
    for j, name in enumerate(('d0', 'd1')):
        w = f(p[f'{name}_w'])                    # (3, 3, MID_in, MID_out) HWIO
        s = col(p[f'{name}_s'])                  # (MID, 1)
        k = 0
        for kh in range(3):
            for kw in range(3):
                blocks.append((f'd{j}_k{k}', _bdiag(s * w[kh, kw].T, bt)))    # (R, R)
                k += 1
    blocks.append(('fc1_b', tile_col(p['fc1_b'])))
    blocks.append(('fc2_b', tile_col(p['fc2_b'])))
    blocks.append(('cr_b',  tile_col(p['cr_b'])))
    blocks.append(('d0_b',  tile_col(p['d0_b'])))
    blocks.append(('d1_b',  tile_col(p['d1_b'])))
    blocks.append(('cf_b',  col(p['cf_b'])))

    lw = max(b.shape[1] for _, b in blocks)
    lw = ((lw + 127) // 128) * 128
    offs, rows = {}, 0
    for name, b in blocks:
        offs[name] = (rows, b.shape[0], b.shape[1])
        rows += ((b.shape[0] + 7) // 8) * 8
    wpk = np.zeros((rows, lw), np.float32)
    for name, b in blocks:
        o, r, c = offs[name]
        wpk[o:o + r, 0:c] = b
    return jnp.asarray(wpk), offs


def _choose_bt(B, per_image_bytes):
    """Batch tile: ~2-4 MiB blocks (amortize per-grid-step overhead) while the
    in+out double buffers stay far below the 32 MiB scoped-VMEM default
    (v7x-safe); prefer >= 2 grid steps so both v7x TensorCores get work,
    unless that would shrink blocks below ~1 MiB."""
    target = max(1, (4 << 20) // max(per_image_bytes, 1))
    bt = max(1, min(B, target))
    while B % bt:
        bt -= 1
    if B // bt < 2:
        for cand in range(bt - 1, 0, -1):
            if B % cand == 0 and B // cand >= 2 and cand * per_image_bytes >= (1 << 20):
                bt = cand
                break
    return bt


def bam_pallas(x_nchw, params, *, bt=None):
    """BAM forward. x_nchw: (B, C, H, W) float32; params from init_params."""
    B, C, H, W = x_nchw.shape
    HW = H * W
    MID = int(np.shape(params['cr_w'])[1])
    assert MID >= 1
    assert C % 8 == 0 and HW % 128 == 0, "lane-dense layout needs C%8==0, HW%128==0"

    per_image_bytes = C * HW * x_nchw.dtype.itemsize
    if bt is None:
        bt = _choose_bt(B, per_image_bytes)
    assert B % bt == 0, "batch tile must divide batch"

    wpk, offs = _pack_weights(params, bt)
    x2 = x_nchw.reshape(B * C, HW)               # free metadata reshape

    kernel = functools.partial(bam_kernel, H=H, W=W, C=C, MID=MID, bt=bt,
                               offs=offs, roll_fwd=_roll_matches_jnp())

    flops_per_img = (2 * HW * C * MID                 # 1x1 reduce conv
                     + 2 * (2 * HW * 9 * MID * MID)   # two dilated 3x3 convs
                     + 2 * HW * MID * C               # final 1x1 conv + broadcast
                     + 4 * C * HW                     # gating product + att*x
                     + 4 * C * MID)                   # channel-gate MLP
    cost = pl.CostEstimate(
        flops=B * flops_per_img,
        transcendentals=B * C * HW,
        bytes_accessed=2 * B * C * HW * x_nchw.dtype.itemsize + int(wpk.size) * 4)

    out = pl.pallas_call(
        kernel,
        out_shape=jax.ShapeDtypeStruct((B * C, HW), x_nchw.dtype),
        grid=(B // bt,),
        in_specs=[pl.BlockSpec((bt * C, HW), lambda i: (i, 0)),
                  pl.BlockSpec(wpk.shape, lambda i: (0, 0))],
        out_specs=pl.BlockSpec((bt * C, HW), lambda i: (i, 0)),
        compiler_params=pltpu.CompilerParams(
            dimension_semantics=("parallel",)),
        cost_estimate=cost,
    )(x2, wpk)
    return out.reshape(B, C, H, W)


# ----------------------------------------------------------------------------
# Synthetic parameters + pure-JAX reference for validation
# ----------------------------------------------------------------------------
def init_params(key, C, reduction=16):
    """Deterministic synthetic parameters; BatchNorm (eval mode) folded in."""
    MID = max(C // reduction, 1)
    eps = 1e-5
    keys = iter(jax.random.split(key, 32))

    def nrm(shape, scale=0.1):
        return (scale * jax.random.normal(next(keys), shape)).astype(jnp.float32)

    def bn(n):
        gamma = 1.0 + nrm((n,))
        beta = nrm((n,))
        rmean = nrm((n,))
        rvar = 1.0 + 0.1 * jax.random.uniform(next(keys), (n,), dtype=jnp.float32)
        s = gamma / jnp.sqrt(rvar + eps)
        return s.astype(jnp.float32), (beta - rmean * s).astype(jnp.float32)

    p = {}
    # Channel gate: Linear(C->MID) + BN1d + ReLU, Linear(MID->C)
    fc1_w, fc1_b = nrm((C, MID)), nrm((MID,))
    s1, b1 = bn(MID)
    p['fc1_w'] = fc1_w
    p['fc1_s'] = s1
    p['fc1_b'] = fc1_b * s1 + b1
    fc2_w, fc2_b = nrm((MID, C)), nrm((C,))
    p['fc2_w'] = fc2_w
    p['fc2_b'] = fc2_b

    # Spatial gate: 1x1 conv (C->MID) + BN + ReLU
    cr_w, cr_b = nrm((C, MID)), nrm((MID,))
    sr, br = bn(MID)
    p['cr_w'] = cr_w
    p['cr_s'] = sr
    p['cr_b'] = cr_b * sr + br

    # Two dilated 3x3 convs (MID->MID, HWIO) + BN + ReLU
    for name in ('d0', 'd1'):
        w = nrm((3, 3, MID, MID))
        b = nrm((MID,))
        s, bb = bn(MID)
        p[f'{name}_w'] = w
        p[f'{name}_s'] = s
        p[f'{name}_b'] = b * s + bb

    # Final 1x1 conv (MID -> 1)
    p['cf_w'] = nrm((MID, 1))
    p['cf_b'] = nrm((1,))
    return p


def bam_reference(x_nchw, p):
    """Pure-JAX reference (NHWC internally) for validation."""
    x = jnp.transpose(x_nchw, (0, 2, 3, 1))
    pooled = x.mean(axis=(1, 2))                                         # (B, C)
    h1 = jnp.maximum(pooled @ p['fc1_w'] * p['fc1_s'] + p['fc1_b'], 0.0)
    ch = h1 @ p['fc2_w'] + p['fc2_b']                                    # (B, C)

    t = jnp.einsum('bhwc,cm->bhwm', x, p['cr_w'])
    t = jnp.maximum(t * p['cr_s'] + p['cr_b'], 0.0)
    for name in ('d0', 'd1'):
        t = lax.conv_general_dilated(
            t, p[f'{name}_w'], window_strides=(1, 1),
            padding=((_DIL, _DIL), (_DIL, _DIL)), rhs_dilation=(_DIL, _DIL),
            dimension_numbers=('NHWC', 'HWIO', 'NHWC'))
        t = jnp.maximum(t * p[f'{name}_s'] + p[f'{name}_b'], 0.0)
    sp = jnp.einsum('bhwm,mo->bhwo', t, p['cf_w']) + p['cf_b']           # (B,H,W,1)

    att = 1.0 + jax.nn.sigmoid(ch[:, None, None, :] * sp)
    return jnp.transpose(att * x, (0, 3, 1, 2))


if __name__ == "__main__":
    key = jax.random.PRNGKey(0)
    kx, kp = jax.random.split(key)

    B, C, H, W = 2, 32, 16, 16        # gate_channel = 32, reduction_ratio = 16
    x = jax.random.normal(kx, (B, C, H, W), dtype=jnp.float32)
    params = init_params(kp, C)

    out = bam_pallas(x, params)
    out = jax.block_until_ready(out)

    ref = bam_reference(x, params)
    assert out.shape == (B, C, H, W)
    if not bool(jnp.allclose(out, ref, atol=2e-3, rtol=2e-3)):
        max_err = float(jnp.max(jnp.abs(out - ref)))
        raise AssertionError(f"Pallas output mismatch, max abs err = {max_err}")

    print("KERNEL_OK")
</pallas_src>

<mosaic_0001>
module attributes {stable_mosaic.version = 11 : i64} {
  func.func @_roll_probe_kernel(%arg0: memref<8x128xi32, #tpu.memory_space<vmem>>, %arg1: memref<8x128xi32, #tpu.memory_space<vmem>>) attributes {dimension_semantics = [], scalar_prefetch = 0 : i64, scratch_operands = 0 : i64, tpu.core_type = #tpu.core_type<tc>} {
    %c0 = arith.constant 0 : index
    %c0_0 = arith.constant 0 : index
    %0 = vector.load %arg0[%c0, %c0_0] : memref<8x128xi32, #tpu.memory_space<vmem>>, vector<8x128xi32>
    %c1_i32 = arith.constant 1 : i32
    %1 = tpu.dynamic_rotate %0 by %c1_i32 dim 1 : vector<8x128xi32>, i32 -> vector<8x128xi32>
    %c0_1 = arith.constant 0 : index
    %c0_2 = arith.constant 0 : index
    %2 = vector.load %arg1[%c0_1, %c0_2] : memref<8x128xi32, #tpu.memory_space<vmem>>, vector<8x128xi32>
    tpu.vector_store %arg1[%c0_1, %c0_2], %1 {strides = array<i32>} : memref<8x128xi32, #tpu.memory_space<vmem>>, vector<8x128xi32>,
    return
  }
}

</mosaic_0001>

<llo_original>
// kernel: tpu_custom_call.1
$region0: #{tpu_custom_call.1}
  #allocation0 [shape = 'u32[]', space=smem, size = 0x4, offset = 0x4, fixed_abs, tag = 'smem constant byte address 0x4 - core index']
  #allocation1 [shape = 'u32[144,128]{1,0:T(1,128)}', space=vmem, size = 0x12000, scoped, tag = 'internal scratch']
  %s0 = inlined_call_operand.hbm [shape: s32[8,128], index: 0, kind: input, shape index: {}]
  %s1 = inlined_call_operand.hbm [shape: s32[8,128], index: 1, kind: output, shape index: {}]
  %s2 = sld [smem:[#allocation0]]
  $region18: #{tpu_custom_call.1} parent=0
    _
  %s4 = ssub.s32 1, %s2
  %s5 = scalar_select 0, %s4, %s2
  $region1: #{tpu_custom_call.1} parent=0
    #allocation2 [shape = 'u8[4096]{0}', space=vmem, size = 0x1000, scoped, tag = 'input window, operand 0, single buffered']
    #allocation3 [shape = 's32[1]{0}', space=sflag, size = 0x4, scoped, tag = 'scoped memory for tpu_custom_call.1']
    #allocation4 [shape = 's32[1]{0}', space=sflag, size = 0x4, scoped, tag = 'scoped memory for tpu_custom_call.1']
    #allocation5 [shape = 'u8[4096]{0}', space=vmem, size = 0x1000, scoped, tag = 'output window, operand 0, single buffered']
    %6 = vsyncpa [#allocation3], 0
    %7 = vsyncpa [#allocation4], 0
    // Predicated region
    $region2: #{tpu_custom_call.1} parent=1 // pred_check
      _
    $region3: #{tpu_custom_call.1} parent=1 // pred_check_branch
      %9 = sbr.rel (0) target = $region5
    $region4: #{tpu_custom_call.1} parent=1 // pred_region
      %s11 = ssub.s32 128, 128
      %12 = vsyncadd [#allocation3], %s11
      %s14 = sshll.u32 [#allocation2], 4
      %s15 = int_to_ptr.vmem [resolvable:$true] %s14
      %17 = dma.hbm_to_vmem [thread:$0]  %s0, 128, %s15, [#allocation3]
    $region5: #{tpu_custom_call.1} parent=1 // pred_fallthru
      _
    // Predicated region
    $region6: #{tpu_custom_call.1} parent=1 // pred_check
      _
    $region7: #{tpu_custom_call.1} parent=1 // pred_check_branch
      %19 = sbr.rel (0) target = $region9
    $region8: #{tpu_custom_call.1} parent=1 // pred_region
      %20 = dma.done [#allocation3], 128
    $region9: #{tpu_custom_call.1} parent=1 // pred_fallthru
      _
    %v21 = vld [vmem:[#allocation2] sm:$0xff]
    %22 = vrot.lane.b32.xlu0 %v21, 1
    %v23 = vpop.permute.xlu0 %22
    %24 = vst [vmem:[#allocation5] sm:$0xff] %v23
    // Predicated region
    $region10: #{tpu_custom_call.1} parent=1 // pred_check
      _
    $region11: #{tpu_custom_call.1} parent=1 // pred_check_branch
      %26 = sbr.rel (0) target = $region13
    $region12: #{tpu_custom_call.1} parent=1 // pred_region
      %s28 = ssub.s32 128, 128
      %29 = vsyncadd [#allocation4], %s28
      %s31 = sshll.u32 [#allocation5], 4
      %s32 = int_to_ptr.vmem [resolvable:$true] %s31
      %34 = dma.vmem_to_hbm [thread:$0]  %s32, 128, %s1, [#allocation4]
    $region13: #{tpu_custom_call.1} parent=1 // pred_fallthru
      _
    // Predicated region
    $region14: #{tpu_custom_call.1} parent=1 // pred_check
      _
    $region15: #{tpu_custom_call.1} parent=1 // pred_check_branch
      %36 = sbr.rel (0) target = $region17
    $region16: #{tpu_custom_call.1} parent=1 // pred_region
      %37 = dma.done [#allocation4], 128
    $region17: #{tpu_custom_call.1} parent=1 // pred_fallthru
      _
    %38 = vsyncpa [#allocation3], 1
    %39 = vsyncpa [#allocation4], 1

</llo_original>
